<compile_context>
chip_gen: v6e
topology: v6e:2x2x1
jax: 0.10.0
libtpu: 0.0.40
codegen_flags: <defaults>
</compile_context>

<pallas_src>
import math

import jax
import jax.numpy as jnp
from jax import lax
from jax.experimental import pallas as pl
from jax.experimental.pallas import tpu as pltpu


NC = 2          # parallel chunks over the entity axis (v7x: one per TensorCore)
MAX_TN = 1024   # entity-tile lanes; re-derive per generation if changed
                # (v5e ~512 at the 16 MiB default scoped VMEM; v7x <=2048 in
                # bf16 under its 64 MiB physical / 32 MiB scoped VMEM)


# ----------------------------------------------------------------------------
# Pallas kernel: the Decoder hot path.
# ----------------------------------------------------------------------------
def pkem_decoder_kernel(ent_ref, rel_ref, tb_ref, we_ref, wr_ref, tbl_ref,
                        out_ref, x_ref):
    # Prologue: compute once per (core-)chunk, stash in a small bf16 scratch.
    @pl.when(pl.program_id(1) == 0)
    def _():
        e = jnp.tanh(ent_ref[...])                                   # (B, H)
        x = (jnp.dot(e, we_ref[...], preferred_element_type=jnp.float32)
             + jnp.dot(rel_ref[...], wr_ref[...],
                       preferred_element_type=jnp.float32)
             + tb_ref[...])                    # tim*w_t + b, prefolded (B, H)
        # dropout is identity in eval mode; relu then cast for the MXU stream.
        x_ref[...] = jnp.maximum(x, 0.0).astype(x_ref.dtype)

    # Score tile: (B, H) bf16 . (TN, H) bf16 contracted over H -> (B, TN) f32.
    # Contract over the last dims directly so the caller never transposes the
    # entity table.
    out_ref[...] = lax.dot_general(
        x_ref[...], tbl_ref[...],
        dimension_numbers=(((1,), (1,)), ((), ())),
        preferred_element_type=jnp.float32)


def prepare_score_table(static_emb, nc=NC, max_tn=MAX_TN):
    """Pad + bf16-cast the entity score table (hoisted out of the hot path)."""
    n, _ = static_emb.shape
    per_chunk = pl.cdiv(n, nc)
    tn = min(max_tn, pl.cdiv(per_chunk, 128) * 128)   # multiple of 128 lanes
    tiles_per_chunk = pl.cdiv(n, nc * tn)
    n_pad = nc * tn * tiles_per_chunk
    tbl = jnp.pad(static_emb, ((0, n_pad - n), (0, 0))).astype(jnp.bfloat16)
    return tbl, tn, tiles_per_chunk


def pkem_decoder_pallas(ent, rel, tim_bias, w_e, w_r, score_tbl,
                        tn, tiles_per_chunk, nc=NC):
    B, H = ent.shape
    n_pad = score_tbl.shape[0]
    assert n_pad == nc * tn * tiles_per_chunk

    const = lambda c, n: (0, 0)   # resident operands: fetched once, reused

    cost = pl.CostEstimate(
        flops=2 * B * H * n_pad + 4 * B * H * H,
        transcendentals=B * H,
        bytes_accessed=(n_pad * H * 2      # bf16 entity table stream
                        + B * n_pad * 4    # f32 score output
                        + 2 * H * H * 4    # We, Wr
                        + 3 * B * H * 4))  # ent, rel, tim_bias

    return pl.pallas_call(
        pkem_decoder_kernel,
        out_shape=jax.ShapeDtypeStruct((B, n_pad), jnp.float32),
        grid_spec=pltpu.PrefetchScalarGridSpec(
            num_scalar_prefetch=0,
            grid=(nc, tiles_per_chunk),
            in_specs=[
                pl.BlockSpec((B, H), const),    # ent
                pl.BlockSpec((B, H), const),    # rel
                pl.BlockSpec((B, H), const),    # tim_bias (tim*w_t + b)
                pl.BlockSpec((H, H), const),    # w_e
                pl.BlockSpec((H, H), const),    # w_r
                # streamed (TN, H) bf16 row tiles of the entity table
                pl.BlockSpec((tn, H),
                             lambda c, n: (c * tiles_per_chunk + n, 0)),
            ],
            out_specs=pl.BlockSpec((B, tn),
                                   lambda c, n: (0, c * tiles_per_chunk + n)),
            scratch_shapes=[pltpu.VMEM((B, H), jnp.bfloat16)],
        ),
        compiler_params=pltpu.CompilerParams(
            dimension_semantics=("parallel", "arbitrary"),
            vmem_limit_bytes=32 * 1024 * 1024),
        cost_estimate=cost,
    )(ent, rel, tim_bias, w_e, w_r, score_tbl)


# ----------------------------------------------------------------------------
# Parameter construction (deterministic, mirrors PKEM_Model.__init__ shapes)
# ----------------------------------------------------------------------------
def make_params(key, num_ent, num_rel, num_attr_values, hidden_dim,
                num_timestamps, period=7, tranx=0.1, ampy=0.005):
    ks = jax.random.split(key, 6)
    relu_gain = math.sqrt(2.0)

    # rel_emb: xavier_uniform with relu gain
    limit = relu_gain * math.sqrt(6.0 / (num_rel + hidden_dim))
    rel_emb = jax.random.uniform(ks[0], (num_rel, hidden_dim),
                                 minval=-limit, maxval=limit, dtype=jnp.float32)
    # ent_emb: normal
    ent_emb = jax.random.normal(ks[1], (num_ent, hidden_dim), dtype=jnp.float32)
    # attr_emb: xavier_normal (unused downstream since RGCN is skipped)
    std = math.sqrt(2.0 / (num_attr_values + hidden_dim))
    attr_emb = std * jax.random.normal(ks[2], (num_attr_values, hidden_dim),
                                       dtype=jnp.float32)
    # time_emb: deterministic sinusoid (event_related=False branch)
    t = jnp.arange(num_timestamps, dtype=jnp.float32)
    time_emb = (ampy * (jnp.sin(2.0 * math.pi * t / period) + 1.0) + tranx
                ).reshape(num_timestamps, 1)

    # Decoder.linear: Linear(2H+1 -> H), PyTorch-default-style uniform init
    fan_in = 2 * hidden_dim + 1
    bound = 1.0 / math.sqrt(fan_in)
    w_full = jax.random.uniform(ks[3], (fan_in, hidden_dim),
                                minval=-bound, maxval=bound, dtype=jnp.float32)
    b_lin = jax.random.uniform(ks[4], (hidden_dim,),
                               minval=-bound, maxval=bound, dtype=jnp.float32)
    w_e = w_full[:hidden_dim, :]                # (H, H)  multiplies tanh(ent)
    w_r = w_full[hidden_dim:2 * hidden_dim, :]  # (H, H)  multiplies rel
    w_t = w_full[2 * hidden_dim:, :]            # (1, H)  multiplies tim scalar

    return dict(rel_emb=rel_emb, ent_emb=ent_emb, attr_emb=attr_emb,
                time_emb=time_emb, w_e=w_e, w_r=w_r, w_t=w_t, b=b_lin)


# ----------------------------------------------------------------------------
# Full forward (event_related=False path)
# ----------------------------------------------------------------------------
def pkem_forward(params, batch_data, num_ent, time_interval,
                 score_tbl=None, tn=None, tiles_per_chunk=None):
    # TODO(synk): static_rgcn_layer(static_graph) skipped — no RGCNBlockLayer
    # definition / DGL graph structure available; use raw entity embeddings.
    static_emb = params["ent_emb"][:num_ent, :]

    if score_tbl is None:
        # Per-call fallback; callers should hoist prepare_score_table() when
        # the entity table is static across calls.
        score_tbl, tn, tiles_per_chunk = prepare_score_table(static_emb)

    ent = static_emb[batch_data[:, 0]]                       # (B, H)
    rel = params["rel_emb"][batch_data[:, 1]]                # (B, H)
    tim = params["time_emb"][batch_data[:, 3] // time_interval]  # (B, 1)

    # Fold the scalar-time column of the decoder linear + bias into one (B, H)
    # operand (removes a lane-sparse (B,1) block + two broadcasts in-kernel).
    tim_bias = tim * params["w_t"] + params["b"]             # (B, H)

    out = pkem_decoder_pallas(ent, rel, tim_bias,
                              params["w_e"], params["w_r"],
                              score_tbl, tn, tiles_per_chunk)
    return out[:, :num_ent]


# Pure-JAX reference (matches the kernel's bf16 score-matmul precision).
def pkem_forward_ref(params, batch_data, num_ent, time_interval):
    static_emb = params["ent_emb"][:num_ent, :]
    ent = static_emb[batch_data[:, 0]]
    rel = params["rel_emb"][batch_data[:, 1]]
    tim = params["time_emb"][batch_data[:, 3] // time_interval]
    e = jnp.tanh(ent)
    x = jnp.concatenate([e, rel, tim], axis=1)
    w_full = jnp.concatenate([params["w_e"], params["w_r"], params["w_t"]],
                             axis=0)
    x = jnp.maximum(x @ w_full + params["b"], 0.0)
    scores = jnp.dot(x.astype(jnp.bfloat16),
                     static_emb.astype(jnp.bfloat16).T,
                     preferred_element_type=jnp.float32)
    return scores.reshape(-1, num_ent)


if __name__ == "__main__":
    num_ent, num_rel = 16, 6
    num_attr_values = 5
    hidden_dim = 32
    time_interval = 1
    num_timestamps = 10
    B = 8

    key = jax.random.PRNGKey(0)
    pkey, dkey = jax.random.split(key)
    params = make_params(pkey, num_ent, num_rel, num_attr_values,
                         hidden_dim, num_timestamps)

    k0, k1, k2 = jax.random.split(dkey, 3)
    batch_data = jnp.stack([
        jax.random.randint(k0, (B,), 0, num_ent),
        jax.random.randint(k1, (B,), 0, num_rel),
        jnp.zeros((B,), dtype=jnp.int32),
        jax.random.randint(k2, (B,), 0, num_timestamps * time_interval),
    ], axis=1)

    # Hoisted once per entity-table update: bf16 cast + lane-dense padding.
    static_emb = params["ent_emb"][:num_ent, :]
    score_tbl, tn, tiles_per_chunk = prepare_score_table(static_emb)

    out = pkem_forward(params, batch_data, num_ent, time_interval,
                       score_tbl=score_tbl, tn=tn,
                       tiles_per_chunk=tiles_per_chunk)
    out = jax.block_until_ready(out)

    ref = pkem_forward_ref(params, batch_data, num_ent, time_interval)
    assert out.shape == (B, num_ent), out.shape
    assert jnp.allclose(out, ref, atol=2e-2, rtol=2e-2), (
        "mismatch vs reference, max abs diff = %f"
        % float(jnp.max(jnp.abs(out - ref))))

    print("KERNEL_OK")
</pallas_src>

<mosaic_0001>
module attributes {stable_mosaic.version = 11 : i64} {
  func.func @pkem_decoder_kernel(%arg0: i32, %arg1: i32, %arg2: memref<8x32xf32, #tpu.memory_space<vmem>>, %arg3: memref<8x32xf32, #tpu.memory_space<vmem>>, %arg4: memref<8x32xf32, #tpu.memory_space<vmem>>, %arg5: memref<32x32xf32, #tpu.memory_space<vmem>>, %arg6: memref<32x32xf32, #tpu.memory_space<vmem>>, %arg7: memref<128x32xbf16, #tpu.memory_space<vmem>>, %arg8: memref<8x128xf32, #tpu.memory_space<vmem>>, %arg9: memref<8x32xbf16, #tpu.memory_space<vmem>>) attributes {dimension_semantics = [#tpu.dimension_semantics<parallel>, #tpu.dimension_semantics<arbitrary>], iteration_bounds = array<i64: 2, 1>, scalar_prefetch = 0 : i64, scratch_operands = 1 : i64, tpu.core_type = #tpu.core_type<tc>, window_params = [{pipeline_mode = #tpu.pipeline_mode<synchronous>, transform_indices = @transform_0, window_bounds = array<i64: 8, 32>}, {pipeline_mode = #tpu.pipeline_mode<synchronous>, transform_indices = @transform_1, window_bounds = array<i64: 8, 32>}, {pipeline_mode = #tpu.pipeline_mode<synchronous>, transform_indices = @transform_2, window_bounds = array<i64: 8, 32>}, {pipeline_mode = #tpu.pipeline_mode<synchronous>, transform_indices = @transform_3, window_bounds = array<i64: 32, 32>}, {pipeline_mode = #tpu.pipeline_mode<synchronous>, transform_indices = @transform_4, window_bounds = array<i64: 32, 32>}, {transform_indices = @transform_5, window_bounds = array<i64: 128, 32>}, {transform_indices = @transform_6, window_bounds = array<i64: 8, 128>}]} {
    %c0_i32 = arith.constant 0 : i32
    %0 = arith.cmpi eq, %arg1, %c0_i32 : i32
    %1 = arith.extui %0 : i1 to i32
    %c0_i32_0 = arith.constant 0 : i32
    %2 = arith.cmpi ne, %1, %c0_i32_0 : i32
    scf.if %2 {
      %c0_6 = arith.constant 0 : index
      %c0_7 = arith.constant 0 : index
      %7 = vector.load %arg2[%c0_6, %c0_7] : memref<8x32xf32, #tpu.memory_space<vmem>>, vector<8x32xf32>
      %8 = math.tanh %7 : vector<8x32xf32>
      %c0_8 = arith.constant 0 : index
      %c0_9 = arith.constant 0 : index
      %9 = vector.load %arg5[%c0_8, %c0_9] : memref<32x32xf32, #tpu.memory_space<vmem>>, vector<32x32xf32>
      %cst_10 = arith.constant dense<0.000000e+00> : vector<8x32xf32>
      %10 = tpu.matmul %8, %9, %cst_10 {dimension_numbers = #tpu.dot_dimension_numbers<[1], [0], [0], [1], [0, 0, 1, 1], [], []>} : vector<8x32xf32>, vector<32x32xf32>, vector<8x32xf32> -> vector<8x32xf32>
      %c0_11 = arith.constant 0 : index
      %c0_12 = arith.constant 0 : index
      %11 = vector.load %arg3[%c0_11, %c0_12] : memref<8x32xf32, #tpu.memory_space<vmem>>, vector<8x32xf32>
      %c0_13 = arith.constant 0 : index
      %c0_14 = arith.constant 0 : index
      %12 = vector.load %arg6[%c0_13, %c0_14] : memref<32x32xf32, #tpu.memory_space<vmem>>, vector<32x32xf32>
      %cst_15 = arith.constant dense<0.000000e+00> : vector<8x32xf32>
      %13 = tpu.matmul %11, %12, %cst_15 {dimension_numbers = #tpu.dot_dimension_numbers<[1], [0], [0], [1], [0, 0, 1, 1], [], []>} : vector<8x32xf32>, vector<32x32xf32>, vector<8x32xf32> -> vector<8x32xf32>
      %14 = arith.addf %10, %13 : vector<8x32xf32>
      %c0_16 = arith.constant 0 : index
      %c0_17 = arith.constant 0 : index
      %15 = vector.load %arg4[%c0_16, %c0_17] : memref<8x32xf32, #tpu.memory_space<vmem>>, vector<8x32xf32>
      %16 = arith.addf %14, %15 : vector<8x32xf32>
      %cst_18 = arith.constant 0.000000e+00 : f32
      %17 = vector.broadcast %cst_18 : f32 to vector<8x32xf32>
      %18 = arith.maximumf %16, %17 : vector<8x32xf32>
      %19 = arith.truncf %18 : vector<8x32xf32> to vector<8x32xbf16>
      %c0_19 = arith.constant 0 : index
      %c0_20 = arith.constant 0 : index
      %20 = vector.load %arg9[%c0_19, %c0_20] : memref<8x32xbf16, #tpu.memory_space<vmem>>, vector<8x32xbf16>
      tpu.vector_store %arg9[%c0_19, %c0_20], %19 {strides = array<i32>} : memref<8x32xbf16, #tpu.memory_space<vmem>>, vector<8x32xbf16>,
    } else {
    }
    %c0 = arith.constant 0 : index
    %c0_1 = arith.constant 0 : index
    %3 = vector.load %arg9[%c0, %c0_1] : memref<8x32xbf16, #tpu.memory_space<vmem>>, vector<8x32xbf16>
    %c0_2 = arith.constant 0 : index
    %c0_3 = arith.constant 0 : index
    %4 = vector.load %arg7[%c0_2, %c0_3] : memref<128x32xbf16, #tpu.memory_space<vmem>>, vector<128x32xbf16>
    %cst = arith.constant dense<0.000000e+00> : vector<8x128xf32>
    %5 = tpu.matmul %3, %4, %cst {dimension_numbers = #tpu.dot_dimension_numbers<[1], [1], [0], [0], [0, 0, 1, 0], [], []>} : vector<8x32xbf16>, vector<128x32xbf16>, vector<8x128xf32> -> vector<8x128xf32>
    %c0_4 = arith.constant 0 : index
    %c0_5 = arith.constant 0 : index
    %6 = vector.load %arg8[%c0_4, %c0_5] : memref<8x128xf32, #tpu.memory_space<vmem>>, vector<8x128xf32>
    tpu.vector_store %arg8[%c0_4, %c0_5], %5 {strides = array<i32>} : memref<8x128xf32, #tpu.memory_space<vmem>>, vector<8x128xf32>,
    return
  }
  func.func @transform_0(%arg0: i32, %arg1: i32) -> (i32, i32) {
    %c0_i32 = arith.constant 0 : i32
    %c0_i32_0 = arith.constant 0 : i32
    %c0_i32_1 = arith.constant 0 : i32
    return %c0_i32, %c0_i32_0 : i32, i32
  }
  func.func @transform_1(%arg0: i32, %arg1: i32) -> (i32, i32) {
    %c0_i32 = arith.constant 0 : i32
    %c0_i32_0 = arith.constant 0 : i32
    %c0_i32_1 = arith.constant 0 : i32
    return %c0_i32, %c0_i32_0 : i32, i32
  }
  func.func @transform_2(%arg0: i32, %arg1: i32) -> (i32, i32) {
    %c0_i32 = arith.constant 0 : i32
    %c0_i32_0 = arith.constant 0 : i32
    %c0_i32_1 = arith.constant 0 : i32
    return %c0_i32, %c0_i32_0 : i32, i32
  }
  func.func @transform_3(%arg0: i32, %arg1: i32) -> (i32, i32) {
    %c0_i32 = arith.constant 0 : i32
    %c0_i32_0 = arith.constant 0 : i32
    %c0_i32_1 = arith.constant 0 : i32
    return %c0_i32, %c0_i32_0 : i32, i32
  }
  func.func @transform_4(%arg0: i32, %arg1: i32) -> (i32, i32) {
    %c0_i32 = arith.constant 0 : i32
    %c0_i32_0 = arith.constant 0 : i32
    %c0_i32_1 = arith.constant 0 : i32
    return %c0_i32, %c0_i32_0 : i32, i32
  }
  func.func @transform_5(%arg0: i32, %arg1: i32) -> (i32, i32) {
    %c1_i32 = arith.constant 1 : i32
    %0 = arith.muli %arg0, %c1_i32 : i32
    %1 = arith.addi %0, %arg1 : i32
    %c0_i32 = arith.constant 0 : i32
    %c0_i32_0 = arith.constant 0 : i32
    return %1, %c0_i32 : i32, i32
  }
  func.func @transform_6(%arg0: i32, %arg1: i32) -> (i32, i32) {
    %c1_i32 = arith.constant 1 : i32
    %0 = arith.muli %arg0, %c1_i32 : i32
    %1 = arith.addi %0, %arg1 : i32
    %c0_i32 = arith.constant 0 : i32
    %c0_i32_0 = arith.constant 0 : i32
    return %c0_i32, %1 : i32, i32
  }
}

</mosaic_0001>

<llo_original>
// kernel: tpu_custom_call.1
$region0: #{tpu_custom_call.1}
  #allocation0 [shape = 'u32[]', space=smem, size = 0x4, offset = 0x4, fixed_abs, tag = 'smem constant byte address 0x4 - core index']
  #allocation1 [shape = 'u32[144,128]{1,0:T(1,128)}', space=vmem, size = 0x12000, scoped, tag = 'internal scratch']
  #allocation2 [shape = 'bf16[8,32]{1,0:T(8,128)(2,1)}', space=vmem, size = 0x800, scoped, tag = 'scratch operand']
  %s0 = inlined_call_operand.vmem [shape: f32[8,32], index: 0, kind: input, shape index: {}]
  %s1 = inlined_call_operand.vmem [shape: f32[8,32], index: 1, kind: input, shape index: {}]
  %s2 = inlined_call_operand.vmem [shape: f32[8,32], index: 2, kind: input, shape index: {}]
  %s3 = inlined_call_operand.vmem [shape: f32[32,32], index: 3, kind: input, shape index: {}]
  %s4 = inlined_call_operand.vmem [shape: f32[32,32], index: 4, kind: input, shape index: {}]
  %s5 = inlined_call_operand.vmem [shape: bf16[256,32], index: 5, kind: input, shape index: {}]
  %s6 = inlined_call_operand.hbm [shape: f32[8,256], index: 6, kind: output, shape index: {}]
  %s7 = sld [smem:[#allocation0]]
  $region61: #{tpu_custom_call.1} parent=0
    _
  %s9 = ssub.s32 1, %s7
  %s10 = scalar_select 0, %s9, %s7
  $region1: #{tpu_custom_call.1} parent=0
    #allocation3 [shape = 'u8[8192]{0}', space=vmem, size = 0x2000, scoped, tag = 'output window, operand 0']
    #allocation4 [shape = 's32[2]{0}', space=sflag, size = 0x8, scoped, tag = 'scoped memory for tpu_custom_call.1']
    %11 = vsyncpa [#allocation4], 0
    %s12 = scalar_lea.sflag [#allocation4], 1
    %13 = vsyncpa %s12, 0
    loop: start=0, step=1, limit=4
    $region2: #{tpu_custom_call.1} parent=1 // loop_pre_header
      _
    $region3: #{tpu_custom_call.1} parent=1 // loop_header
      %s15 = sphi 0, %s19
      %p16 = scmp.ge.s32.totalorder %s15, 4
      %s22 = sphi 0, %s34
      %s23 = sphi 0, %s30
      %s24 = sphi 0, %s22
      %s25 = sphi 0, %s23
      %s26 = sphi 0, %s24
      %s27 = sphi 0, %s25
      %s35 = sphi 0, %s35
      %s37 = sphi 0, %s35
      %s38 = sphi 0, %s37
      %s52 = sphi 0, %s38
      %s56 = sphi 0, %s56
      %s58 = sphi 0, %s56
      %s59 = sphi 0, %s58
      %s73 = sphi 0, %s59
      %s77 = sphi 0, %s77
      %s79 = sphi 0, %s77
      %s80 = sphi 0, %s79
      %s94 = sphi 0, %s80
      %s98 = sphi 0, %s98
      %s100 = sphi 0, %s98
      %s101 = sphi 0, %s100
      %s115 = sphi 0, %s101
      %s119 = sphi 0, %s119
      %s121 = sphi 0, %s119
      %s122 = sphi 0, %s121
      %s136 = sphi 0, %s122
      %s144 = sphi 0, %s146
      %s147 = sphi 0, %s144
      %s148 = sphi 0, %s147
      %s164 = sphi 0, %s148
      %s172 = sphi 0, %s174
      %s175 = sphi 0, %s172
      %s176 = sphi 0, %s175
      %s192 = sphi 0, %s176
    $region4: #{tpu_custom_call.1} parent=1 // loop_header_branch
      %18 = sbr.rel (%p16) target = $region8
    $region5: #{tpu_custom_call.1} parent=1 // loop_body
      %s20 = ssub.s32 %s15, 1
      %s21 = ssub.s32 %s15, 2
      %s28 = sadd.s32 1, %s23
      %p29 = scmp.ge.s32.totalorder %s28, 1
      %s30 = scalar_select %p29, 0, %s28
      %s31 = sadd.s32 1, %s22
      %s32 = scalar_select %p29, %s31, %s22
      %p33 = scmp.ge.s32.totalorder %s32, 2
      %s34 = scalar_select %p33, 0, %s32
      %s36 = sadd.s32 %s35, 1
      %p39 = scmp.eq.s32.totalorder %s15, 1
      %p40 = scmp.ne.s32.totalorder %s35, %s37
      %p41 = scmp.eq.s32.totalorder %s15, 0
      %p42 = por %p40, %p41
      %p43 = scmp.ne.s32.totalorder %s35, %s37
      %p44 = scmp.eq.s32.totalorder %s20, 1
      %p45 = por %p43, %p44
      %p46 = scmp.ne.s32.totalorder %s37, %s38
      %p47 = scmp.eq.s32.totalorder %s20, 0
      %p48 = por %p46, %p47
      %p49 = scmp.ne.s32.totalorder %s37, %s38
      %p50 = scmp.eq.s32.totalorder %s21, 1
      %p51 = por %p49, %p50
      %p53 = scmp.ne.s32.totalorder %s38, %s52
      %p54 = scmp.eq.s32.totalorder %s21, 0
      %p55 = por %p53, %p54
      %s57 = sadd.s32 %s56, 1
      %p60 = scmp.eq.s32.totalorder %s15, 1
      %p61 = scmp.ne.s32.totalorder %s56, %s58
      %p62 = scmp.eq.s32.totalorder %s15, 0
      %p63 = por %p61, %p62
      %p64 = scmp.ne.s32.totalorder %s56, %s58
      %p65 = scmp.eq.s32.totalorder %s20, 1
      %p66 = por %p64, %p65
      %p67 = scmp.ne.s32.totalorder %s58, %s59
      %p68 = scmp.eq.s32.totalorder %s20, 0
      %p69 = por %p67, %p68
      %p70 = scmp.ne.s32.totalorder %s58, %s59
      %p71 = scmp.eq.s32.totalorder %s21, 1
      %p72 = por %p70, %p71
      %p74 = scmp.ne.s32.totalorder %s59, %s73
      %p75 = scmp.eq.s32.totalorder %s21, 0
      %p76 = por %p74, %p75
      %s78 = sadd.s32 %s77, 1
      %p81 = scmp.eq.s32.totalorder %s15, 1
      %p82 = scmp.ne.s32.totalorder %s77, %s79
      %p83 = scmp.eq.s32.totalorder %s15, 0
      %p84 = por %p82, %p83
      %p85 = scmp.ne.s32.totalorder %s77, %s79
      %p86 = scmp.eq.s32.totalorder %s20, 1
      %p87 = por %p85, %p86
      %p88 = scmp.ne.s32.totalorder %s79, %s80
      %p89 = scmp.eq.s32.totalorder %s20, 0
      %p90 = por %p88, %p89
      %p91 = scmp.ne.s32.totalorder %s79, %s80
      %p92 = scmp.eq.s32.totalorder %s21, 1
      %p93 = por %p91, %p92
      %p95 = scmp.ne.s32.totalorder %s80, %s94
      %p96 = scmp.eq.s32.totalorder %s21, 0
      %p97 = por %p95, %p96
      %s99 = sadd.s32 %s98, 1
      %p102 = scmp.eq.s32.totalorder %s15, 1
      %p103 = scmp.ne.s32.totalorder %s98, %s100
      %p104 = scmp.eq.s32.totalorder %s15, 0
      %p105 = por %p103, %p104
      %p106 = scmp.ne.s32.totalorder %s98, %s100
      %p107 = scmp.eq.s32.totalorder %s20, 1
      %p108 = por %p106, %p107
      %p109 = scmp.ne.s32.totalorder %s100, %s101
      %p110 = scmp.eq.s32.totalorder %s20, 0
      %p111 = por %p109, %p110
      %p112 = scmp.ne.s32.totalorder %s100, %s101
      %p113 = scmp.eq.s32.totalorder %s21, 1
      %p114 = por %p112, %p113
      %p116 = scmp.ne.s32.totalorder %s101, %s115
      %p117 = scmp.eq.s32.totalorder %s21, 0
      %p118 = por %p116, %p117
      %s120 = sadd.s32 %s119, 1
      %p123 = scmp.eq.s32.totalorder %s15, 1
      %p124 = scmp.ne.s32.totalorder %s119, %s121
      %p125 = scmp.eq.s32.totalorder %s15, 0
      %p126 = por %p124, %p125
      %p127 = scmp.ne.s32.totalorder %s119, %s121
      %p128 = scmp.eq.s32.totalorder %s20, 1
      %p129 = por %p127, %p128
      %p130 = scmp.ne.s32.totalorder %s121, %s122
      %p131 = scmp.eq.s32.totalorder %s20, 0
      %p132 = por %p130, %p131
      %p133 = scmp.ne.s32.totalorder %s121, %s122
      %p134 = scmp.eq.s32.totalorder %s21, 1
      %p135 = por %p133, %p134
      %p137 = scmp.ne.s32.totalorder %s122, %s136
      %p138 = scmp.eq.s32.totalorder %s21, 0
      %p139 = por %p137, %p138
      %s140 = sadd.s32 %s22, %s23
      %s141 = sadd.s32 %s34, %s30
      %s142 = ssub.s32 %s140, %s141
      %p143 = scmp.eq.s32.totalorder %s142, 0
      %s145 = sadd.s32 %s144, 1
      %s146 = scalar_select %p143, %s144, %s145
      %p149 = pneg %p143
      %p150 = scmp.eq.s32.totalorder %s15, 1
      %p151 = por %p149, %p150
      %p152 = scmp.ne.s32.totalorder %s144, %s147
      %p153 = scmp.eq.s32.totalorder %s15, 0
      %p154 = por %p152, %p153
      %p155 = scmp.ne.s32.totalorder %s144, %s147
      %p156 = scmp.eq.s32.totalorder %s20, 1
      %p157 = por %p155, %p156
      %p158 = scmp.ne.s32.totalorder %s147, %s148
      %p159 = scmp.eq.s32.totalorder %s20, 0
      %p160 = por %p158, %p159
      %p161 = scmp.ne.s32.totalorder %s147, %s148
      %p162 = scmp.eq.s32.totalorder %s21, 1
      %p163 = por %p161, %p162
      %p165 = scmp.ne.s32.totalorder %s148, %s164
      %p166 = scmp.eq.s32.totalorder %s21, 0
      %p167 = por %p165, %p166
      %s168 = sadd.s32 %s22, %s23
      %s169 = sadd.s32 %s34, %s30
      %s170 = ssub.s32 %s168, %s169
      %p171 = scmp.eq.s32.totalorder %s170, 0
      %s173 = sadd.s32 %s172, 1
      %s174 = scalar_select %p171, %s172, %s173
      %p177 = pneg %p171
      %p178 = scmp.eq.s32.totalorder %s15, 1
      %p179 = por %p177, %p178
      %p180 = scmp.ne.s32.totalorder %s172, %s175
      %p181 = scmp.eq.s32.totalorder %s15, 0
      %p182 = por %p180, %p181
      %p183 = scmp.ne.s32.totalorder %s172, %s175
      %p184 = scmp.eq.s32.totalorder %s20, 1
      %p185 = por %p183, %p184
      %p186 = scmp.ne.s32.totalorder %s175, %s176
      %p187 = scmp.eq.s32.totalorder %s20, 0
      %p188 = por %p186, %p187
      %p189 = scmp.ne.s32.totalorder %s175, %s176
      %p190 = scmp.eq.s32.totalorder %s21, 1
      %p191 = por %p189, %p190
      %p193 = scmp.ne.s32.totalorder %s176, %s192
      %p194 = scmp.eq.s32.totalorder %s21, 0
      %p195 = por %p193, %p194
      %p196 = scmp.le.s32.totalorder 1, %s15
      %p197 = scmp.lt.s32.totalorder %s15, 3
      %p198 = pnand %p196, %p197
      %p199 = pneg %p198
      // Predicated region
      $region9: #{tpu_custom_call.1} parent=5 // pred_check
        _
      $region10: #{tpu_custom_call.1} parent=5 // pred_check_branch
        %201 = sbr.rel (%p198) target = $region12
      $region11: #{tpu_custom_call.1} parent=5 // pred_region
        %s202 = ssub.s32 %s15, 1
        // Predicated region
        $region13: #{tpu_custom_call.1} parent=11 // pred_check
          %p203 = pneg %p48
        $region14: #{tpu_custom_call.1} parent=11 // pred_check_branch
          %205 = sbr.rel (%p203) target = $region16
        $region15: #{tpu_custom_call.1} parent=11 // pred_region
          _
        $region16: #{tpu_custom_call.1} parent=11 // pred_fallthru
          _
        // Predicated region
        $region17: #{tpu_custom_call.1} parent=11 // pred_check
          %p206 = pneg %p69
        $region18: #{tpu_custom_call.1} parent=11 // pred_check_branch
          %208 = sbr.rel (%p206) target = $region20
        $region19: #{tpu_custom_call.1} parent=11 // pred_region
          _
        $region20: #{tpu_custom_call.1} parent=11 // pred_fallthru
          _
        // Predicated region
        $region21: #{tpu_custom_call.1} parent=11 // pred_check
          %p209 = pneg %p90
        $region22: #{tpu_custom_call.1} parent=11 // pred_check_branch
          %211 = sbr.rel (%p209) target = $region24
        $region23: #{tpu_custom_call.1} parent=11 // pred_region
          _
        $region24: #{tpu_custom_call.1} parent=11 // pred_fallthru
          _
        // Predicated region
        $region25: #{tpu_custom_call.1} parent=11 // pred_check
          %p212 = pneg %p111
        $region26: #{tpu_custom_call.1} parent=11 // pred_check_branch
          %214 = sbr.rel (%p212) target = $region28
        $region27: #{tpu_custom_call.1} parent=11 // pred_region
          _
        $region28: #{tpu_custom_call.1} parent=11 // pred_fallthru
          _
        // Predicated region
        $region29: #{tpu_custom_call.1} parent=11 // pred_check
          %p215 = pneg %p132
        $region30: #{tpu_custom_call.1} parent=11 // pred_check_branch
          %217 = sbr.rel (%p215) target = $region32
        $region31: #{tpu_custom_call.1} parent=11 // pred_region
          _
        $region32: #{tpu_custom_call.1} parent=11 // pred_fallthru
          _
      $region12: #{tpu_custom_call.1} parent=5 // pred_fallthru
        _
      %p218 = scmp.lt.s32.totalorder %s15, 2
      // Predicated region
      $region33: #{tpu_custom_call.1} parent=5 // pred_check
        %p219 = pneg %p218
      $region34: #{tpu_custom_call.1} parent=5 // pred_check_branch
        %221 = sbr.rel (%p219) target = $region36
      $region35: #{tpu_custom_call.1} parent=5 // pred_region
        // Predicated region
        $region37: #{tpu_custom_call.1} parent=35 // pred_check
          %p222 = pneg %p154
        $region38: #{tpu_custom_call.1} parent=35 // pred_check_branch
          %224 = sbr.rel (%p222) target = $region40
        $region39: #{tpu_custom_call.1} parent=35 // pred_region
          %s225 = sadd.s32 %s22, %s23
          %s226 = smul.u32 16, %s225
          %p227 = scmp.lt.s32.totalorder %s226, 31
          %s228 = scalar_select %p227, %s226, 31
          %s229 = smul.addr %s228, 4
          %s230 = scalar_lea.vmem %s5, %s229
          %s231 = sadd.s32 %s22, %s23
          %s232 = smul.u32 16, %s231
        $region40: #{tpu_custom_call.1} parent=35 // pred_fallthru
          _
      $region36: #{tpu_custom_call.1} parent=5 // pred_fallthru
        _
      %p233 = scmp.le.s32.totalorder 1, %s15
      %p234 = scmp.lt.s32.totalorder %s15, 3
      %p235 = pnand %p233, %p234
      %p236 = pneg %p235
      // Predicated region
      $region41: #{tpu_custom_call.1} parent=5 // pred_check
        _
      $region42: #{tpu_custom_call.1} parent=5 // pred_check_branch
        %238 = sbr.rel (%p235) target = $region44
      $region43: #{tpu_custom_call.1} parent=5 // pred_region
        %s239 = ssub.s32 %s15, 1
        %p240 = pneg %p48
        %p241 = pneg %p45
        %p242 = pneg %p69
        %p243 = pneg %p66
        %p244 = pneg %p90
        %p245 = pneg %p87
        %p246 = pneg %p111
        %p247 = pneg %p108
        %p248 = pneg %p132
        %p249 = pneg %p129
        %s250 = sadd.s32 %s24, %s25
        %s251 = smul.u32 16, %s250
        %p252 = scmp.lt.s32.totalorder %s251, 31
        %s253 = scalar_select %p252, %s251, 31
        %s254 = smul.addr %s253, 4
        %s255 = scalar_lea.vmem %s5, %s254
        %p256 = pneg %p160
        %p257 = pneg %p157
        %p258 = pneg %p188
        %p259 = pneg %p185
        %s260 = sand.u32 %s175, 1
        %s261 = scalar_lea.sflag [#allocation4], %s260
        %s262 = sand.u32 %s175, 1
        %s263 = smul.addr %s262, 8
        %s264 = scalar_lea.vmem [#allocation3], %s263
        %s265 = sadd.s32 %s24, %s25
        %s266 = smul.u32 16, %s265
        %p267 = scmp.lt.s32.totalorder %s266, 31
        %s268 = scalar_select %p267, %s266, 31
        %s269 = smul.addr %s268, 4
        %s270 = scalar_lea.vmem %s5, %s269
        %s271 = sadd.s32 %s24, %s25
        %s272 = smul.u32 16, %s271
        %s273 = sadd.s32 %s24, %s25
        %p275 = scmp.eq.s32.totalorder %s25, 0
        // Predicated region
        $region45: #{tpu_custom_call.1} parent=43 // pred_check
          %p276 = pneg %p275
        $region46: #{tpu_custom_call.1} parent=43 // pred_check_branch
          %278 = sbr.rel (%p276) target = $region48
        $region47: #{tpu_custom_call.1} parent=43 // pred_region
          %v279 = vld [vmem:[%s0] sm:$0xff]
          %v280 = vtanh.pop %v279
          %v281 = vld [vmem:[%s3] sm:$0xff]
          %v282 = vld [vmem:[%s3 + $0x8] sm:$0xff]
          %v283 = vld [vmem:[%s3 + $0x10] sm:$0xff]
          %v284 = vld [vmem:[%s3 + $0x18] sm:$0xff]
          %v285 = vld [vmem:[%s1] sm:$0xff]
          %v286 = vld [vmem:[%s4] sm:$0xff]
          %v287 = vld [vmem:[%s4 + $0x8] sm:$0xff]
          %v288 = vld [vmem:[%s4 + $0x10] sm:$0xff]
          %v289 = vld [vmem:[%s4 + $0x18] sm:$0xff]
          %vm290 = vcmask 261120
          %v292 = vsel %vm290, %v285, 0
          %294 = vmatprep.subr.mxu0 0.0
          %295 = vmatpush1.msra.mxu0 0.0
          %296 = vmatprep.subr.mxu0 0.0
          %297 = vmatpush1.msra.mxu0 0.0
          %298 = vmatprep.subr.mxu0 0.0
          %299 = vmatpush1.msra.mxu0 0.0
          %300 = vmatprep.subr.mxu0 0.0
          %301 = vmatpush1.msra.mxu0 0.0
          %302 = vmatprep.subr.mxu0 0.0
          %303 = vmatpush1.msra.mxu0 0.0
          %304 = vmatprep.subr.mxu0 0.0
          %305 = vmatpush1.msra.mxu0 0.0
          %306 = vmatprep.subr.mxu0 0.0
          %307 = vmatpush1.msra.mxu0 0.0
          %308 = vmatprep.subr.mxu0 0.0
          %309 = vmatpush1.msra.mxu0 0.0
          %310 = vmatprep.subr.mxu0 0.0
          %311 = vmatpush1.msra.mxu0 0.0
          %312 = vmatprep.subr.mxu0 0.0
          %313 = vmatpush1.msra.mxu0 0.0
          %314 = vmatprep.subr.mxu0 0.0
          %315 = vmatpush1.msra.mxu0 0.0
          %316 = vmatprep.subr.mxu0 0.0
          %317 = vmatpush1.msra.mxu0 0.0
          %318 = vmatprep.subr.mxu0 0.0
          %319 = vmatpush1.msra.mxu0 %v289
          %320 = vmatprep.subr.mxu0 0.0
          %321 = vmatpush1.msra.mxu0 %v288
          %322 = vmatprep.subr.mxu0 0.0
          %323 = vmatpush1.msra.mxu0 %v287
          %324 = vmatprep.subr.mxu0 0.0
          %325 = vmatpush1.msra.mxu0 %v286
          %326 = vmatprep.subr.mxu0 0.0
          %327 = vmatpush2.msra.mxu0 0.0
          %328 = vmatprep.subr.mxu0 0.0
          %329 = vmatpush2.msra.mxu0 0.0
          %330 = vmatprep.subr.mxu0 0.0
          %331 = vmatpush2.msra.mxu0 0.0
          %332 = vmatprep.subr.mxu0 0.0
          %333 = vmatpush2.msra.mxu0 0.0
          %334 = vmatprep.subr.mxu0 0.0
          %335 = vmatpush2.msra.mxu0 0.0
          %336 = vmatprep.subr.mxu0 0.0
          %337 = vmatpush2.msra.mxu0 0.0
          %338 = vmatprep.subr.mxu0 0.0
          %339 = vmatpush2.msra.mxu0 0.0
          %340 = vmatprep.subr.mxu0 0.0
          %341 = vmatpush2.msra.mxu0 0.0
          %342 = vmatprep.subr.mxu0 0.0
          %343 = vmatpush2.msra.mxu0 0.0
          %344 = vmatprep.subr.mxu0 0.0
          %345 = vmatpush2.msra.mxu0 0.0
          %346 = vmatprep.subr.mxu0 0.0
          %347 = vmatpush2.msra.mxu0 0.0
          %348 = vmatprep.subr.mxu0 0.0
          %349 = vmatpush2.msra.mxu0 0.0
          %350 = vmatprep.subr.mxu0 0.0
          %351 = vmatpush2.msra.mxu0 0.0
          %352 = vmatprep.subr.mxu0 0.0
          %353 = vmatpush2.msra.mxu0 0.0
          %354 = vmatprep.subr.mxu0 0.0
          %355 = vmatpush2.msra.mxu0 0.0
          %356 = vmatprep.subr.mxu0 0.0
          %357 = vmatpush2.msra.mxu0 0.0
          %358 = vmatprep.mubr.f32.mxu0 0.0
          %359 = vmatmul.mubr.f32.gmra.mxu0 %v292
          %v360 = vpop.f32.mrf.mxu0
          %v361 = vadd.f32 0.0, %v360
          %v362 = vpop.f32.mrf.mxu0
          %363 = vdwg.mxu0
          %v365 = vsel %vm290, %v280, 0
          %367 = vmatprep.subr.mxu0 0.0
          %368 = vmatpush1.msra.mxu0 0.0
          %369 = vmatprep.subr.mxu0 0.0
          %370 = vmatpush1.msra.mxu0 0.0
          %371 = vmatprep.subr.mxu0 0.0
          %372 = vmatpush1.msra.mxu0 0.0
          %373 = vmatprep.subr.mxu0 0.0
          %374 = vmatpush1.msra.mxu0 0.0
          %375 = vmatprep.subr.mxu0 0.0
          %376 = vmatpush1.msra.mxu0 0.0
          %377 = vmatprep.subr.mxu0 0.0
          %378 = vmatpush1.msra.mxu0 0.0
          %379 = vmatprep.subr.mxu0 0.0
          %380 = vmatpush1.msra.mxu0 0.0
          %381 = vmatprep.subr.mxu0 0.0
          %382 = vmatpush1.msra.mxu0 0.0
          %383 = vmatprep.subr.mxu0 0.0
          %384 = vmatpush1.msra.mxu0 0.0
          %385 = vmatprep.subr.mxu0 0.0
          %386 = vmatpush1.msra.mxu0 0.0
          %387 = vmatprep.subr.mxu0 0.0
          %388 = vmatpush1.msra.mxu0 0.0
          %389 = vmatprep.subr.mxu0 0.0
          %390 = vmatpush1.msra.mxu0 0.0
          %391 = vmatprep.subr.mxu0 0.0
          %392 = vmatpush1.msra.mxu0 %v284
          %393 = vmatprep.subr.mxu0 0.0
          %394 = vmatpush1.msra.mxu0 %v283
          %395 = vmatprep.subr.mxu0 0.0
          %396 = vmatpush1.msra.mxu0 %v282
          %397 = vmatprep.subr.mxu0 0.0
          %398 = vmatpush1.msra.mxu0 %v281
          %399 = vmatprep.subr.mxu0 0.0
          %400 = vmatpush2.msra.mxu0 0.0
          %401 = vmatprep.subr.mxu0 0.0
          %402 = vmatpush2.msra.mxu0 0.0
          %403 = vmatprep.subr.mxu0 0.0
          %404 = vmatpush2.msra.mxu0 0.0
          %405 = vmatprep.subr.mxu0 0.0
          %406 = vmatpush2.msra.mxu0 0.0
          %407 = vmatprep.subr.mxu0 0.0
          %408 = vmatpush2.msra.mxu0 0.0
          %409 = vmatprep.subr.mxu0 0.0
          %410 = vmatpush2.msra.mxu0 0.0
          %411 = vmatprep.subr.mxu0 0.0
          %412 = vmatpush2.msra.mxu0 0.0
          %413 = vmatprep.subr.mxu0 0.0
          %414 = vmatpush2.msra.mxu0 0.0
          %415 = vmatprep.subr.mxu0 0.0
          %416 = vmatpush2.msra.mxu0 0.0
          %417 = vmatprep.subr.mxu0 0.0
          %418 = vmatpush2.msra.mxu0 0.0
          %419 = vmatprep.subr.mxu0 0.0
          %420 = vmatpush2.msra.mxu0 0.0
          %421 = vmatprep.subr.mxu0 0.0
          %422 = vmatpush2.msra.mxu0 0.0
          %423 = vmatprep.subr.mxu0 0.0
          %424 = vmatpush2.msra.mxu0 0.0
          %425 = vmatprep.subr.mxu0 0.0
          %426 = vmatpush2.msra.mxu0 0.0
          %427 = vmatprep.subr.mxu0 0.0
          %428 = vmatpush2.msra.mxu0 0.0
          %429 = vmatprep.subr.mxu0 0.0
          %430 = vmatpush2.msra.mxu0 0.0
          %431 = vmatprep.mubr.f32.mxu0 0.0
          %432 = vmatmul.mubr.f32.gmra.mxu0 %v365
          %v433 = vpop.f32.mrf.mxu0
          %v434 = vadd.f32 %v361, %v433
          %v435 = vpop.f32.mrf.mxu0
          %436 = vdwg.mxu0
          %v437 = vld [vmem:[%s2] sm:$0xff]
          %v438 = vadd.f32 %v434, %v437
          %v439 = vmax.f32 %v438, 0.0
          %v440 = vpack.c.bf16 %v439, %v439
          %vm441 = vcmask 257024
          %442 = vst.msk [vmem:[#allocation2] sm:$0xf] %vm441, %v440
        $region48: #{tpu_custom_call.1} parent=43 // pred_fallthru
          _
        %v443 = vld [vmem:[#allocation2] sm:$0xf]
        %v444 = vld [vmem:[%s270] sm:$0xf]
        %v445 = vld [vmem:[%s270 + $0x4] sm:$0xf]
        %v446 = vld [vmem:[%s270 + $0x8] sm:$0xf]
        %v447 = vld [vmem:[%s270 + $0xc] sm:$0xf]
        %v448 = vld [vmem:[%s270 + $0x10] sm:$0xf]
        %v449 = vld [vmem:[%s270 + $0x14] sm:$0xf]
        %v450 = vld [vmem:[%s270 + $0x18] sm:$0xf]
        %v451 = vld [vmem:[%s270 + $0x1c] sm:$0xf]
        %v452 = vld [vmem:[%s270 + $0x20] sm:$0xf]
        %v453 = vld [vmem:[%s270 + $0x24] sm:$0xf]
        %v454 = vld [vmem:[%s270 + $0x28] sm:$0xf]
        %v455 = vld [vmem:[%s270 + $0x2c] sm:$0xf]
        %v456 = vld [vmem:[%s270 + $0x30] sm:$0xf]
        %v457 = vld [vmem:[%s270 + $0x34] sm:$0xf]
        %v458 = vld [vmem:[%s270 + $0x38] sm:$0xf]
        %v459 = vld [vmem:[%s270 + $0x3c] sm:$0xf]
        %v476 = vunpack.c.l.b16 %v444
        %v477 = vunpack.c.l.b16 %v445
        %v478 = vunpack.c.l.b16 %v446
        %v479 = vunpack.c.l.b16 %v447
        %v480 = vunpack.c.l.b16 %v448
        %v481 = vunpack.c.l.b16 %v449
        %v482 = vunpack.c.l.b16 %v450
        %v483 = vunpack.c.l.b16 %v451
        %v484 = vunpack.c.l.b16 %v452
        %v485 = vunpack.c.l.b16 %v453
        %v486 = vunpack.c.l.b16 %v454
        %v487 = vunpack.c.l.b16 %v455
        %v488 = vunpack.c.l.b16 %v456
        %v489 = vunpack.c.l.b16 %v457
        %v490 = vunpack.c.l.b16 %v458
        %v491 = vunpack.c.l.b16 %v459
        %v492 = vpack.c.b16 %v477, %v476
        %v493 = vpack.c.b16 %v479, %v478
        %v494 = vpack.c.b16 %v481, %v480
        %v495 = vpack.c.b16 %v483, %v482
        %v496 = vpack.c.b16 %v485, %v484
        %v497 = vpack.c.b16 %v487, %v486
        %v498 = vpack.c.b16 %v489, %v488
        %v499 = vpack.c.b16 %v491, %v490
        %vm500 = vcmask 261120
        %v502 = vsel %vm500, %v443, 0
        %v505 = vsel %vm500, %v492, 0
        %v508 = vsel %vm500, %v493, 0
        %v511 = vsel %vm500, %v494, 0
        %v514 = vsel %vm500, %v495, 0
        %v517 = vsel %vm500, %v496, 0
        %v520 = vsel %vm500, %v497, 0
        %v523 = vsel %vm500, %v498, 0
        %v526 = vsel %vm500, %v499, 0
        %528 = vmatprep.subr.bf16.mxu0 0
        %529 = vmatpush1.bf16.xpose.msra.mxu0 %v526
        %530 = vmatprep.subr.bf16.mxu0 0
        %531 = vmatpush1.bf16.xpose.msra.mxu0 %v523
        %532 = vmatprep.subr.bf16.mxu0 0
        %533 = vmatpush1.bf16.xpose.msra.mxu0 %v520
        %534 = vmatprep.subr.bf16.mxu0 0
        %535 = vmatpush1.bf16.xpose.msra.mxu0 %v517
        %536 = vmatprep.subr.bf16.mxu0 0
        %537 = vmatpush1.bf16.xpose.msra.mxu0 %v514
        %538 = vmatprep.subr.bf16.mxu0 0
        %539 = vmatpush1.bf16.xpose.msra.mxu0 %v511
        %540 = vmatprep.subr.bf16.mxu0 0
        %541 = vmatpush1.bf16.xpose.msra.mxu0 %v508
        %542 = vmatprep.subr.bf16.mxu0 0
        %543 = vmatpush1.bf16.xpose.msra.mxu0 %v505
        %544 = vmatprep.subr.bf16.mxu0 0
        %545 = vmatpush2.bf16.xpose.msra.mxu0 0
        %546 = vmatprep.subr.bf16.mxu0 0
        %547 = vmatpush2.bf16.xpose.msra.mxu0 0
        %548 = vmatprep.subr.bf16.mxu0 0
        %549 = vmatpush2.bf16.xpose.msra.mxu0 0
        %550 = vmatprep.subr.bf16.mxu0 0
        %551 = vmatpush2.bf16.xpose.msra.mxu0 0
        %552 = vmatprep.subr.bf16.mxu0 0
        %553 = vmatpush2.bf16.xpose.msra.mxu0 0
        %554 = vmatprep.subr.bf16.mxu0 0
        %555 = vmatpush2.bf16.xpose.msra.mxu0 0
        %556 = vmatprep.subr.bf16.mxu0 0
        %557 = vmatpush2.bf16.xpose.msra.mxu0 0
        %558 = vmatprep.subr.bf16.mxu0 0
        %559 = vmatpush2.bf16.xpose.msra.mxu0 0
        %560 = vmatprep.mubr.bf16.mxu0 0
        %561 = vmatmul.mubr.bf16.gmra.mxu0 %v502
        %v562 = vpop.f32.mrf.mxu0
        %v563 = vadd.f32 0.0, %v562
        %v564 = vpop.f32.mrf.mxu0
        %v565 = vpop.f32.mrf.mxu0
        %v566 = vpop.f32.mrf.mxu0
        %567 = vdwg.mxu0
        %568 = vst [vmem:[%s264] sm:$0xff] %v563
        %s569 = sand.u32 %s175, 1
        %s570 = scalar_lea.sflag [#allocation4], %s569
        %s571 = sand.u32 %s175, 1
        %s572 = smul.addr %s571, 8
        %s573 = scalar_lea.vmem [#allocation3], %s572
        // Predicated region
        $region49: #{tpu_custom_call.1} parent=43 // pred_check
          %p574 = pneg %p185
        $region50: #{tpu_custom_call.1} parent=43 // pred_check_branch
          %576 = sbr.rel (%p574) target = $region52
        $region51: #{tpu_custom_call.1} parent=43 // pred_region
          %s577 = sadd.s32 %s24, %s25
          %s579 = ssub.s32 128, 128
          %580 = vsyncadd %s570, %s579
          %s581 = smul.addr %s577, 128
          %s582 = scalar_lea.hbm %s6, %s581
          %s584 = sshll.u32 %s573, 4
          %s585 = int_to_ptr.vmem [resolvable:$true] %s584
          %587 = dma.vmem_to_hbm [thread:$0]  %s585, 128, %s582, %s570
        $region52: #{tpu_custom_call.1} parent=43 // pred_fallthru
          _
      $region44: #{tpu_custom_call.1} parent=5 // pred_fallthru
        _
      %p588 = scmp.le.s32.totalorder 2, %s15
      // Predicated region
      $region53: #{tpu_custom_call.1} parent=5 // pred_check
        %p589 = pneg %p588
      $region54: #{tpu_custom_call.1} parent=5 // pred_check_branch
        %591 = sbr.rel (%p589) target = $region56
      $region55: #{tpu_custom_call.1} parent=5 // pred_region
        %s592 = ssub.s32 %s15, 2
        // Predicated region
        $region57: #{tpu_custom_call.1} parent=55 // pred_check
          %p593 = pneg %p191
        $region58: #{tpu_custom_call.1} parent=55 // pred_check_branch
          %595 = sbr.rel (%p593) target = $region60
        $region59: #{tpu_custom_call.1} parent=55 // pred_region
          %s596 = sand.u32 %s176, 1
          %s597 = scalar_lea.sflag [#allocation4], %s596
          %s598 = sand.u32 %s176, 1
          %s599 = smul.addr %s598, 8
          %s600 = scalar_lea.vmem [#allocation3], %s599
          %601 = dma.done %s597, 128
        $region60: #{tpu_custom_call.1} parent=55 // pred_fallthru
          _
      $region56: #{tpu_custom_call.1} parent=5 // pred_fallthru
        _
    $region6: #{tpu_custom_call.1} parent=1 // loop_footer
      %s19 = sadd.s32 1, %s15
    $region7: #{tpu_custom_call.1} parent=1 // loop_footer_branch
      %14 = sbr.rel target = $region3
    $region8: #{tpu_custom_call.1} parent=1 // loop_exit
      _
    %602 = vsyncpa [#allocation4], 1
    %s603 = scalar_lea.sflag [#allocation4], 1
    %604 = vsyncpa %s603, 1

</llo_original>
